<compile_context>
chip_gen: v6e
topology: v6e:2x2x1
jax: 0.10.0
libtpu: 0.0.40
codegen_flags: <defaults>
</compile_context>

<pallas_src>
import jax
import jax.numpy as jnp
from jax.experimental import pallas as pl
from jax.experimental.pallas import tpu as pltpu


def _round_up(x, m):
    return pl.cdiv(x, m) * m


def lora_kernel(x_ref, w1t_ref, w2t_ref, o_ref):
    # x_ref:   (TM, in_p)       streamed M-tile of x (K zero-padded iff needed)
    # w1t_ref: (in_p, r_p)      W1.T (zero-padded), VMEM-resident across grid
    # w2t_ref: (r_p, out_dim)   W2.T (rank dim zero-padded), VMEM-resident
    # o_ref:   (TM, out_dim)    output tile (full lane dim of the output array)
    h = jnp.dot(x_ref[...], w1t_ref[...], preferred_element_type=jnp.float32)
    # Dropout: inference/eval mode -> identity.
    # TODO(synk): training-mode dropout would use pltpu.prng_seed + prng_random_bits.
    # For f32 inputs the astype is a no-op; for bf16 inputs it feeds the second
    # MXU pass in bf16 (f32 accumulate via preferred_element_type).
    y = jnp.dot(h.astype(x_ref.dtype), w2t_ref[...],
                preferred_element_type=jnp.float32)
    o_ref[...] = y.astype(o_ref.dtype)


def _vmem_budgets():
    """(tile-selection budget, explicit scoped vmem limit) per generation."""
    try:
        cap = int(pltpu.get_tpu_info().vmem_capacity_bytes)
    except Exception:
        cap = 64 << 20   # conservative fallback (v7x per-TC size) -> safe everywhere
    # ~64 MiB budget on 128-MiB parts (v5e/v6e), ~45 MiB on v7x's 64-MiB TCs.
    budget = min(64 << 20, int(cap * 0.70))
    # Explicit scoped limit: above the budget (headroom for compiler scratch),
    # below physical capacity.  Also lifts v5e's 16-MiB default scoped limit.
    limit = min(int(cap * 0.90), 100 << 20)
    return budget, limit


def _choose_tm(m, in_p, r_p, out_lanes_p, itemsize, sub, tm_max, vmem_budget):
    """Largest M-tile (multiple of `sub`, <= tm_max) whose double-buffered
    streamed tiles + resident weights + f32 intermediates fit the budget."""
    tm = min(tm_max, _round_up(m, sub))
    if m > sub:
        # Guarantee >= 2 grid steps so the "parallel" M axis can be sharded
        # across both TensorCores (v7x megacore) and the pipeline has overlap.
        tm = min(tm, _round_up(pl.cdiv(m, 2), sub))
    weights = 2 * (in_p + out_lanes_p) * r_p * itemsize      # default 2 bufs each
    while tm > sub:
        streamed = 2 * tm * (in_p + out_lanes_p) * itemsize  # x + out tiles, 2 bufs
        f32_tmps = tm * (r_p + out_lanes_p) * 4               # h + pre-cast 2nd dot
        if weights + streamed + f32_tmps + (2 << 20) <= vmem_budget:
            break
        tm = _round_up(tm // 2, sub)
    return max(tm, sub)


def lora_forward(x, w1, w2, *, tm_max=1024):
    """x: (..., input_dim); w1: (r, input_dim); w2: (output_dim, r)."""
    orig_shape = x.shape
    input_dim = orig_shape[-1]
    r = w1.shape[0]
    output_dim = w2.shape[0]

    dtype = x.dtype
    itemsize = jnp.dtype(dtype).itemsize
    sub = 16 if dtype == jnp.bfloat16 else 8     # sublane multiple per dtype

    x2d = x.reshape(-1, input_dim)
    m = x2d.shape[0]

    # Contraction lane dim zero-padded only when not 128-aligned; rank padded to
    # 128 so h / weight tiles get non-degenerate lane layouts (weights are tiny).
    in_p = _round_up(input_dim, 128)
    r_p = _round_up(r, 128)
    out_lanes_p = _round_up(output_dim, 128)     # VMEM-accounting only

    if in_p != input_dim:
        x_in = jnp.pad(x2d, ((0, 0), (0, in_p - input_dim)))
    else:
        x_in = x2d                                # no extra HBM round-trip

    # Tiny weights: pre-transpose + zero-pad wrapper-side (negligible bytes).
    # NOTE: cast to activation dtype (bf16 activations quantize f32 LoRA weights
    # to bf16 -- fine for inference, documented deviation from the f32 ref).
    w1t = jnp.pad(w1.T.astype(dtype), ((0, in_p - input_dim), (0, r_p - r)))
    w2t = jnp.pad(w2.T.astype(dtype), ((0, r_p - r), (0, 0)))   # (r_p, output_dim)

    vmem_budget, vmem_limit = _vmem_budgets()
    tm = _choose_tm(m, in_p, r_p, out_lanes_p, itemsize, sub, tm_max, vmem_budget)
    grid = (pl.cdiv(m, tm),)                      # ragged M: no pad, no slice

    flops = 2 * m * r * (input_dim + output_dim)
    bytes_accessed = (m * (input_dim + output_dim)
                      + r * (input_dim + output_dim)) * itemsize

    out = pl.pallas_call(
        lora_kernel,
        out_shape=jax.ShapeDtypeStruct((m, output_dim), dtype),
        grid_spec=pl.GridSpec(
            grid=grid,
            in_specs=[
                # Streamed x tile.  TODO(synk): sweep pipeline_mode=pl.Buffered(3)
                # if profiling shows exposed DMA at small TM / narrow in_p.
                pl.BlockSpec((tm, in_p), lambda i: (i, 0)),
                # VMEM-resident weights (constant block index across the grid).
                pl.BlockSpec((in_p, r_p), lambda i: (0, 0)),
                pl.BlockSpec((r_p, output_dim), lambda i: (0, 0)),
            ],
            # Full-array lane dim: masked stores iff output_dim % 128 != 0,
            # which beats a padded output tensor + trailing slice by a mile.
            out_specs=pl.BlockSpec((tm, output_dim), lambda i: (i, 0)),
        ),
        compiler_params=pltpu.CompilerParams(
            dimension_semantics=("parallel",),    # shard M-tiles across TCs
            vmem_limit_bytes=vmem_limit),
        cost_estimate=pl.CostEstimate(flops=flops, transcendentals=0,
                                      bytes_accessed=bytes_accessed),
    )(x_in, w1t, w2t)

    return out.reshape(*orig_shape[:-1], output_dim)


if __name__ == "__main__":
    # Small shapes consistent with the module: batch=2, seq=8, hidden=32, r=4.
    batch, seq = 2, 8
    input_dim, r, output_dim = 32, 4, 32

    key = jax.random.PRNGKey(0)
    kx, k1, k2 = jax.random.split(key, 3)
    x = jax.random.normal(kx, (batch, seq, input_dim), dtype=jnp.float32)
    # nn.Linear weight shapes: (out_features, in_features).
    w1 = jax.random.normal(k1, (r, input_dim), dtype=jnp.float32) * 0.1
    w2 = jax.random.normal(k2, (output_dim, r), dtype=jnp.float32) * 0.1

    y = lora_forward(x, w1, w2)
    jax.block_until_ready(y)

    # Cross-check against plain-JAX reference of the PyTorch semantics.
    y_ref = (x @ w1.T) @ w2.T
    assert y.shape == (batch, seq, output_dim)
    assert jnp.allclose(y, y_ref, atol=1e-5, rtol=1e-5)

    print("KERNEL_OK")
</pallas_src>

<mosaic_0001>
module attributes {stable_mosaic.version = 11 : i64} {
  func.func @lora_kernel(%arg0: i32, %arg1: memref<8x128xf32, #tpu.memory_space<vmem>>, %arg2: memref<128x128xf32, #tpu.memory_space<vmem>>, %arg3: memref<128x32xf32, #tpu.memory_space<vmem>>, %arg4: memref<8x32xf32, #tpu.memory_space<vmem>>) attributes {dimension_semantics = [#tpu.dimension_semantics<parallel>], iteration_bounds = array<i64: 2>, scalar_prefetch = 0 : i64, scratch_operands = 0 : i64, tpu.core_type = #tpu.core_type<tc>, window_params = [{transform_indices = @transform_0, window_bounds = array<i64: 8, 128>}, {pipeline_mode = #tpu.pipeline_mode<synchronous>, transform_indices = @transform_1, window_bounds = array<i64: 128, 128>}, {pipeline_mode = #tpu.pipeline_mode<synchronous>, transform_indices = @transform_2, window_bounds = array<i64: 128, 32>}, {transform_indices = @transform_3, window_bounds = array<i64: 8, 32>}]} {
    %c0 = arith.constant 0 : index
    %c0_0 = arith.constant 0 : index
    %0 = vector.load %arg1[%c0, %c0_0] : memref<8x128xf32, #tpu.memory_space<vmem>>, vector<8x128xf32>
    %c0_1 = arith.constant 0 : index
    %c0_2 = arith.constant 0 : index
    %1 = vector.load %arg2[%c0_1, %c0_2] : memref<128x128xf32, #tpu.memory_space<vmem>>, vector<128x128xf32>
    %cst = arith.constant dense<0.000000e+00> : vector<8x128xf32>
    %2 = tpu.matmul %0, %1, %cst {dimension_numbers = #tpu.dot_dimension_numbers<[1], [0], [0], [1], [0, 0, 1, 1], [], []>} : vector<8x128xf32>, vector<128x128xf32>, vector<8x128xf32> -> vector<8x128xf32>
    %c0_3 = arith.constant 0 : index
    %c0_4 = arith.constant 0 : index
    %3 = vector.load %arg3[%c0_3, %c0_4] : memref<128x32xf32, #tpu.memory_space<vmem>>, vector<128x32xf32>
    %cst_5 = arith.constant dense<0.000000e+00> : vector<8x32xf32>
    %4 = tpu.matmul %2, %3, %cst_5 {dimension_numbers = #tpu.dot_dimension_numbers<[1], [0], [0], [1], [0, 0, 1, 1], [], []>} : vector<8x128xf32>, vector<128x32xf32>, vector<8x32xf32> -> vector<8x32xf32>
    %c0_6 = arith.constant 0 : index
    %c0_7 = arith.constant 0 : index
    %5 = vector.load %arg4[%c0_6, %c0_7] : memref<8x32xf32, #tpu.memory_space<vmem>>, vector<8x32xf32>
    tpu.vector_store %arg4[%c0_6, %c0_7], %4 {strides = array<i32>} : memref<8x32xf32, #tpu.memory_space<vmem>>, vector<8x32xf32>,
    return
  }
  func.func @transform_0(%arg0: i32) -> (i32, i32) {
    %c0_i32 = arith.constant 0 : i32
    %c0_i32_0 = arith.constant 0 : i32
    return %arg0, %c0_i32 : i32, i32
  }
  func.func @transform_1(%arg0: i32) -> (i32, i32) {
    %c0_i32 = arith.constant 0 : i32
    %c0_i32_0 = arith.constant 0 : i32
    %c0_i32_1 = arith.constant 0 : i32
    return %c0_i32, %c0_i32_0 : i32, i32
  }
  func.func @transform_2(%arg0: i32) -> (i32, i32) {
    %c0_i32 = arith.constant 0 : i32
    %c0_i32_0 = arith.constant 0 : i32
    %c0_i32_1 = arith.constant 0 : i32
    return %c0_i32, %c0_i32_0 : i32, i32
  }
  func.func @transform_3(%arg0: i32) -> (i32, i32) {
    %c0_i32 = arith.constant 0 : i32
    %c0_i32_0 = arith.constant 0 : i32
    return %arg0, %c0_i32 : i32, i32
  }
}

</mosaic_0001>

<llo_original>
// kernel: tpu_custom_call.1
$region0: #{tpu_custom_call.1}
  #allocation0 [shape = 'u32[]', space=smem, size = 0x4, offset = 0x4, fixed_abs, tag = 'smem constant byte address 0x4 - core index']
  #allocation1 [shape = 'u32[144,128]{1,0:T(1,128)}', space=vmem, size = 0x12000, scoped, tag = 'internal scratch']
  %s0 = inlined_call_operand.vmem [shape: f32[16,128], index: 0, kind: input, shape index: {}]
  %s1 = inlined_call_operand.vmem [shape: f32[128,128], index: 1, kind: input, shape index: {}]
  %s2 = inlined_call_operand.vmem [shape: f32[128,32], index: 2, kind: input, shape index: {}]
  %s3 = inlined_call_operand.hbm [shape: f32[16,32], index: 3, kind: output, shape index: {}]
  %s4 = sld [smem:[#allocation0]]
  $region45: #{tpu_custom_call.1} parent=0
    _
  %s6 = ssub.s32 1, %s4
  %s7 = scalar_select 0, %s6, %s4
  $region1: #{tpu_custom_call.1} parent=0
    #allocation2 [shape = 'u8[8192]{0}', space=vmem, size = 0x2000, scoped, tag = 'output window, operand 0']
    #allocation3 [shape = 's32[2]{0}', space=sflag, size = 0x8, scoped, tag = 'scoped memory for tpu_custom_call.1']
    %8 = vsyncpa [#allocation3], 0
    %s9 = scalar_lea.sflag [#allocation3], 1
    %10 = vsyncpa %s9, 0
    loop: start=0, step=1, limit=4
    $region2: #{tpu_custom_call.1} parent=1 // loop_pre_header
      _
    $region3: #{tpu_custom_call.1} parent=1 // loop_header
      %s12 = sphi 0, %s16
      %p13 = scmp.ge.s32.totalorder %s12, 4
      %s22 = sphi 0, %s24
      %s25 = sphi 0, %s22
      %s26 = sphi 0, %s25
      %s42 = sphi 0, %s26
      %s46 = sphi 0, %s46
      %s48 = sphi 0, %s46
      %s49 = sphi 0, %s48
      %s63 = sphi 0, %s49
      %s67 = sphi 0, %s67
      %s69 = sphi 0, %s67
      %s70 = sphi 0, %s69
      %s84 = sphi 0, %s70
      %s90 = sphi 0, %s92
      %s93 = sphi 0, %s90
      %s94 = sphi 0, %s93
      %s110 = sphi 0, %s94
    $region4: #{tpu_custom_call.1} parent=1 // loop_header_branch
      %15 = sbr.rel (%p13) target = $region8
    $region5: #{tpu_custom_call.1} parent=1 // loop_body
      %s17 = ssub.s32 %s12, 1
      %s18 = ssub.s32 %s12, 2
      %s19 = sadd.s32 %s12, 1
      %s20 = ssub.s32 %s12, %s19
      %p21 = scmp.eq.s32.totalorder %s20, 0
      %s23 = sadd.s32 %s22, 1
      %s24 = scalar_select %p21, %s22, %s23
      %p27 = pneg %p21
      %p28 = scmp.eq.s32.totalorder %s12, 1
      %p29 = por %p27, %p28
      %p30 = scmp.ne.s32.totalorder %s22, %s25
      %p31 = scmp.eq.s32.totalorder %s12, 0
      %p32 = por %p30, %p31
      %p33 = scmp.ne.s32.totalorder %s22, %s25
      %p34 = scmp.eq.s32.totalorder %s17, 1
      %p35 = por %p33, %p34
      %p36 = scmp.ne.s32.totalorder %s25, %s26
      %p37 = scmp.eq.s32.totalorder %s17, 0
      %p38 = por %p36, %p37
      %p39 = scmp.ne.s32.totalorder %s25, %s26
      %p40 = scmp.eq.s32.totalorder %s18, 1
      %p41 = por %p39, %p40
      %p43 = scmp.ne.s32.totalorder %s26, %s42
      %p44 = scmp.eq.s32.totalorder %s18, 0
      %p45 = por %p43, %p44
      %s47 = sadd.s32 %s46, 1
      %p50 = scmp.eq.s32.totalorder %s12, 1
      %p51 = scmp.ne.s32.totalorder %s46, %s48
      %p52 = scmp.eq.s32.totalorder %s12, 0
      %p53 = por %p51, %p52
      %p54 = scmp.ne.s32.totalorder %s46, %s48
      %p55 = scmp.eq.s32.totalorder %s17, 1
      %p56 = por %p54, %p55
      %p57 = scmp.ne.s32.totalorder %s48, %s49
      %p58 = scmp.eq.s32.totalorder %s17, 0
      %p59 = por %p57, %p58
      %p60 = scmp.ne.s32.totalorder %s48, %s49
      %p61 = scmp.eq.s32.totalorder %s18, 1
      %p62 = por %p60, %p61
      %p64 = scmp.ne.s32.totalorder %s49, %s63
      %p65 = scmp.eq.s32.totalorder %s18, 0
      %p66 = por %p64, %p65
      %s68 = sadd.s32 %s67, 1
      %p71 = scmp.eq.s32.totalorder %s12, 1
      %p72 = scmp.ne.s32.totalorder %s67, %s69
      %p73 = scmp.eq.s32.totalorder %s12, 0
      %p74 = por %p72, %p73
      %p75 = scmp.ne.s32.totalorder %s67, %s69
      %p76 = scmp.eq.s32.totalorder %s17, 1
      %p77 = por %p75, %p76
      %p78 = scmp.ne.s32.totalorder %s69, %s70
      %p79 = scmp.eq.s32.totalorder %s17, 0
      %p80 = por %p78, %p79
      %p81 = scmp.ne.s32.totalorder %s69, %s70
      %p82 = scmp.eq.s32.totalorder %s18, 1
      %p83 = por %p81, %p82
      %p85 = scmp.ne.s32.totalorder %s70, %s84
      %p86 = scmp.eq.s32.totalorder %s18, 0
      %p87 = por %p85, %p86
      %s88 = ssub.s32 %s12, %s19
      %p89 = scmp.eq.s32.totalorder %s88, 0
      %s91 = sadd.s32 %s90, 1
      %s92 = scalar_select %p89, %s90, %s91
      %p95 = pneg %p89
      %p96 = scmp.eq.s32.totalorder %s12, 1
      %p97 = por %p95, %p96
      %p98 = scmp.ne.s32.totalorder %s90, %s93
      %p99 = scmp.eq.s32.totalorder %s12, 0
      %p100 = por %p98, %p99
      %p101 = scmp.ne.s32.totalorder %s90, %s93
      %p102 = scmp.eq.s32.totalorder %s17, 1
      %p103 = por %p101, %p102
      %p104 = scmp.ne.s32.totalorder %s93, %s94
      %p105 = scmp.eq.s32.totalorder %s17, 0
      %p106 = por %p104, %p105
      %p107 = scmp.ne.s32.totalorder %s93, %s94
      %p108 = scmp.eq.s32.totalorder %s18, 1
      %p109 = por %p107, %p108
      %p111 = scmp.ne.s32.totalorder %s94, %s110
      %p112 = scmp.eq.s32.totalorder %s18, 0
      %p113 = por %p111, %p112
      %p114 = scmp.le.s32.totalorder 1, %s12
      %p115 = scmp.lt.s32.totalorder %s12, 3
      %p116 = pnand %p114, %p115
      %p117 = pneg %p116
      // Predicated region
      $region9: #{tpu_custom_call.1} parent=5 // pred_check
        _
      $region10: #{tpu_custom_call.1} parent=5 // pred_check_branch
        %119 = sbr.rel (%p116) target = $region12
      $region11: #{tpu_custom_call.1} parent=5 // pred_region
        %s120 = ssub.s32 %s12, 1
        // Predicated region
        $region13: #{tpu_custom_call.1} parent=11 // pred_check
          %p121 = pneg %p59
        $region14: #{tpu_custom_call.1} parent=11 // pred_check_branch
          %123 = sbr.rel (%p121) target = $region16
        $region15: #{tpu_custom_call.1} parent=11 // pred_region
          _
        $region16: #{tpu_custom_call.1} parent=11 // pred_fallthru
          _
        // Predicated region
        $region17: #{tpu_custom_call.1} parent=11 // pred_check
          %p124 = pneg %p80
        $region18: #{tpu_custom_call.1} parent=11 // pred_check_branch
          %126 = sbr.rel (%p124) target = $region20
        $region19: #{tpu_custom_call.1} parent=11 // pred_region
          _
        $region20: #{tpu_custom_call.1} parent=11 // pred_fallthru
          _
      $region12: #{tpu_custom_call.1} parent=5 // pred_fallthru
        _
      %p127 = scmp.lt.s32.totalorder %s12, 2
      // Predicated region
      $region21: #{tpu_custom_call.1} parent=5 // pred_check
        %p128 = pneg %p127
      $region22: #{tpu_custom_call.1} parent=5 // pred_check_branch
        %130 = sbr.rel (%p128) target = $region24
      $region23: #{tpu_custom_call.1} parent=5 // pred_region
        // Predicated region
        $region25: #{tpu_custom_call.1} parent=23 // pred_check
          %p131 = pneg %p32
        $region26: #{tpu_custom_call.1} parent=23 // pred_check_branch
          %133 = sbr.rel (%p131) target = $region28
        $region27: #{tpu_custom_call.1} parent=23 // pred_region
          %p134 = scmp.lt.s32.totalorder %s12, 1
          %s135 = scalar_select %p134, %s12, 1
          %s136 = smul.addr %s135, 8
          %s137 = scalar_lea.vmem %s0, %s136
        $region28: #{tpu_custom_call.1} parent=23 // pred_fallthru
          _
      $region24: #{tpu_custom_call.1} parent=5 // pred_fallthru
        _
      %p138 = scmp.le.s32.totalorder 1, %s12
      %p139 = scmp.lt.s32.totalorder %s12, 3
      %p140 = pnand %p138, %p139
      %p141 = pneg %p140
      // Predicated region
      $region29: #{tpu_custom_call.1} parent=5 // pred_check
        _
      $region30: #{tpu_custom_call.1} parent=5 // pred_check_branch
        %143 = sbr.rel (%p140) target = $region32
      $region31: #{tpu_custom_call.1} parent=5 // pred_region
        %s144 = ssub.s32 %s12, 1
        %p145 = scmp.lt.s32.totalorder %s17, 1
        %s146 = scalar_select %p145, %s17, 1
        %s147 = smul.addr %s146, 8
        %s148 = scalar_lea.vmem %s0, %s147
        %p149 = pneg %p38
        %p150 = pneg %p35
        %p151 = pneg %p59
        %p152 = pneg %p56
        %p153 = pneg %p80
        %p154 = pneg %p77
        %p155 = pneg %p106
        %p156 = pneg %p103
        %s157 = sand.u32 %s93, 1
        %s158 = scalar_lea.sflag [#allocation3], %s157
        %s159 = sand.u32 %s93, 1
        %s160 = smul.addr %s159, 8
        %s161 = scalar_lea.vmem [#allocation2], %s160
        %p162 = scmp.lt.s32.totalorder %s17, 1
        %s163 = scalar_select %p162, %s17, 1
        %s164 = smul.addr %s163, 8
        %s165 = scalar_lea.vmem %s0, %s164
        %v166 = vld [vmem:[%s165] sm:$0xff]
        %v167 = vld [vmem:[%s1] sm:$0xff]
        %v168 = vld [vmem:[%s1 + $0x8] sm:$0xff]
        %v169 = vld [vmem:[%s1 + $0x10] sm:$0xff]
        %v170 = vld [vmem:[%s1 + $0x18] sm:$0xff]
        %v171 = vld [vmem:[%s1 + $0x20] sm:$0xff]
        %v172 = vld [vmem:[%s1 + $0x28] sm:$0xff]
        %v173 = vld [vmem:[%s1 + $0x30] sm:$0xff]
        %v174 = vld [vmem:[%s1 + $0x38] sm:$0xff]
        %v175 = vld [vmem:[%s1 + $0x40] sm:$0xff]
        %v176 = vld [vmem:[%s1 + $0x48] sm:$0xff]
        %v177 = vld [vmem:[%s1 + $0x50] sm:$0xff]
        %v178 = vld [vmem:[%s1 + $0x58] sm:$0xff]
        %v179 = vld [vmem:[%s1 + $0x60] sm:$0xff]
        %v180 = vld [vmem:[%s1 + $0x68] sm:$0xff]
        %v181 = vld [vmem:[%s1 + $0x70] sm:$0xff]
        %v182 = vld [vmem:[%s1 + $0x78] sm:$0xff]
        %183 = vmatprep.subr.mxu0 0.0
        %184 = vmatpush1.msra.mxu0 %v182
        %185 = vmatprep.subr.mxu0 0.0
        %186 = vmatpush1.msra.mxu0 %v181
        %187 = vmatprep.subr.mxu0 0.0
        %188 = vmatpush1.msra.mxu0 %v180
        %189 = vmatprep.subr.mxu0 0.0
        %190 = vmatpush1.msra.mxu0 %v179
        %191 = vmatprep.subr.mxu0 0.0
        %192 = vmatpush1.msra.mxu0 %v178
        %193 = vmatprep.subr.mxu0 0.0
        %194 = vmatpush1.msra.mxu0 %v177
        %195 = vmatprep.subr.mxu0 0.0
        %196 = vmatpush1.msra.mxu0 %v176
        %197 = vmatprep.subr.mxu0 0.0
        %198 = vmatpush1.msra.mxu0 %v175
        %199 = vmatprep.subr.mxu0 0.0
        %200 = vmatpush1.msra.mxu0 %v174
        %201 = vmatprep.subr.mxu0 0.0
        %202 = vmatpush1.msra.mxu0 %v173
        %203 = vmatprep.subr.mxu0 0.0
        %204 = vmatpush1.msra.mxu0 %v172
        %205 = vmatprep.subr.mxu0 0.0
        %206 = vmatpush1.msra.mxu0 %v171
        %207 = vmatprep.subr.mxu0 0.0
        %208 = vmatpush1.msra.mxu0 %v170
        %209 = vmatprep.subr.mxu0 0.0
        %210 = vmatpush1.msra.mxu0 %v169
        %211 = vmatprep.subr.mxu0 0.0
        %212 = vmatpush1.msra.mxu0 %v168
        %213 = vmatprep.subr.mxu0 0.0
        %214 = vmatpush1.msra.mxu0 %v167
        %215 = vmatprep.subr.mxu0 0.0
        %216 = vmatpush2.msra.mxu0 0.0
        %217 = vmatprep.subr.mxu0 0.0
        %218 = vmatpush2.msra.mxu0 0.0
        %219 = vmatprep.subr.mxu0 0.0
        %220 = vmatpush2.msra.mxu0 0.0
        %221 = vmatprep.subr.mxu0 0.0
        %222 = vmatpush2.msra.mxu0 0.0
        %223 = vmatprep.subr.mxu0 0.0
        %224 = vmatpush2.msra.mxu0 0.0
        %225 = vmatprep.subr.mxu0 0.0
        %226 = vmatpush2.msra.mxu0 0.0
        %227 = vmatprep.subr.mxu0 0.0
        %228 = vmatpush2.msra.mxu0 0.0
        %229 = vmatprep.subr.mxu0 0.0
        %230 = vmatpush2.msra.mxu0 0.0
        %231 = vmatprep.subr.mxu0 0.0
        %232 = vmatpush2.msra.mxu0 0.0
        %233 = vmatprep.subr.mxu0 0.0
        %234 = vmatpush2.msra.mxu0 0.0
        %235 = vmatprep.subr.mxu0 0.0
        %236 = vmatpush2.msra.mxu0 0.0
        %237 = vmatprep.subr.mxu0 0.0
        %238 = vmatpush2.msra.mxu0 0.0
        %239 = vmatprep.subr.mxu0 0.0
        %240 = vmatpush2.msra.mxu0 0.0
        %241 = vmatprep.subr.mxu0 0.0
        %242 = vmatpush2.msra.mxu0 0.0
        %243 = vmatprep.subr.mxu0 0.0
        %244 = vmatpush2.msra.mxu0 0.0
        %245 = vmatprep.subr.mxu0 0.0
        %246 = vmatpush2.msra.mxu0 0.0
        %247 = vmatprep.mubr.f32.mxu0 0.0
        %248 = vmatmul.mubr.f32.gmra.mxu0 %v166
        %v249 = vpop.f32.mrf.mxu0
        %v250 = vadd.f32 0.0, %v249
        %v251 = vpop.f32.mrf.mxu0
        %252 = vdwg.mxu0
        %v253 = vld [vmem:[%s2] sm:$0xff]
        %v254 = vld [vmem:[%s2 + $0x8] sm:$0xff]
        %v255 = vld [vmem:[%s2 + $0x10] sm:$0xff]
        %v256 = vld [vmem:[%s2 + $0x18] sm:$0xff]
        %v257 = vld [vmem:[%s2 + $0x20] sm:$0xff]
        %v258 = vld [vmem:[%s2 + $0x28] sm:$0xff]
        %v259 = vld [vmem:[%s2 + $0x30] sm:$0xff]
        %v260 = vld [vmem:[%s2 + $0x38] sm:$0xff]
        %v261 = vld [vmem:[%s2 + $0x40] sm:$0xff]
        %v262 = vld [vmem:[%s2 + $0x48] sm:$0xff]
        %v263 = vld [vmem:[%s2 + $0x50] sm:$0xff]
        %v264 = vld [vmem:[%s2 + $0x58] sm:$0xff]
        %v265 = vld [vmem:[%s2 + $0x60] sm:$0xff]
        %v266 = vld [vmem:[%s2 + $0x68] sm:$0xff]
        %v267 = vld [vmem:[%s2 + $0x70] sm:$0xff]
        %v268 = vld [vmem:[%s2 + $0x78] sm:$0xff]
        %269 = vmatprep.subr.mxu0 0.0
        %270 = vmatpush1.msra.mxu0 %v268
        %271 = vmatprep.subr.mxu0 0.0
        %272 = vmatpush1.msra.mxu0 %v267
        %273 = vmatprep.subr.mxu0 0.0
        %274 = vmatpush1.msra.mxu0 %v266
        %275 = vmatprep.subr.mxu0 0.0
        %276 = vmatpush1.msra.mxu0 %v265
        %277 = vmatprep.subr.mxu0 0.0
        %278 = vmatpush1.msra.mxu0 %v264
        %279 = vmatprep.subr.mxu0 0.0
        %280 = vmatpush1.msra.mxu0 %v263
        %281 = vmatprep.subr.mxu0 0.0
        %282 = vmatpush1.msra.mxu0 %v262
        %283 = vmatprep.subr.mxu0 0.0
        %284 = vmatpush1.msra.mxu0 %v261
        %285 = vmatprep.subr.mxu0 0.0
        %286 = vmatpush1.msra.mxu0 %v260
        %287 = vmatprep.subr.mxu0 0.0
        %288 = vmatpush1.msra.mxu0 %v259
        %289 = vmatprep.subr.mxu0 0.0
        %290 = vmatpush1.msra.mxu0 %v258
        %291 = vmatprep.subr.mxu0 0.0
        %292 = vmatpush1.msra.mxu0 %v257
        %293 = vmatprep.subr.mxu0 0.0
        %294 = vmatpush1.msra.mxu0 %v256
        %295 = vmatprep.subr.mxu0 0.0
        %296 = vmatpush1.msra.mxu0 %v255
        %297 = vmatprep.subr.mxu0 0.0
        %298 = vmatpush1.msra.mxu0 %v254
        %299 = vmatprep.subr.mxu0 0.0
        %300 = vmatpush1.msra.mxu0 %v253
        %301 = vmatprep.subr.mxu0 0.0
        %302 = vmatpush2.msra.mxu0 0.0
        %303 = vmatprep.subr.mxu0 0.0
        %304 = vmatpush2.msra.mxu0 0.0
        %305 = vmatprep.subr.mxu0 0.0
        %306 = vmatpush2.msra.mxu0 0.0
        %307 = vmatprep.subr.mxu0 0.0
        %308 = vmatpush2.msra.mxu0 0.0
        %309 = vmatprep.subr.mxu0 0.0
        %310 = vmatpush2.msra.mxu0 0.0
        %311 = vmatprep.subr.mxu0 0.0
        %312 = vmatpush2.msra.mxu0 0.0
        %313 = vmatprep.subr.mxu0 0.0
        %314 = vmatpush2.msra.mxu0 0.0
        %315 = vmatprep.subr.mxu0 0.0
        %316 = vmatpush2.msra.mxu0 0.0
        %317 = vmatprep.subr.mxu0 0.0
        %318 = vmatpush2.msra.mxu0 0.0
        %319 = vmatprep.subr.mxu0 0.0
        %320 = vmatpush2.msra.mxu0 0.0
        %321 = vmatprep.subr.mxu0 0.0
        %322 = vmatpush2.msra.mxu0 0.0
        %323 = vmatprep.subr.mxu0 0.0
        %324 = vmatpush2.msra.mxu0 0.0
        %325 = vmatprep.subr.mxu0 0.0
        %326 = vmatpush2.msra.mxu0 0.0
        %327 = vmatprep.subr.mxu0 0.0
        %328 = vmatpush2.msra.mxu0 0.0
        %329 = vmatprep.subr.mxu0 0.0
        %330 = vmatpush2.msra.mxu0 0.0
        %331 = vmatprep.subr.mxu0 0.0
        %332 = vmatpush2.msra.mxu0 0.0
        %333 = vmatprep.mubr.f32.mxu0 0.0
        %334 = vmatmul.mubr.f32.gmra.mxu0 %v250
        %v335 = vpop.f32.mrf.mxu0
        %v336 = vadd.f32 0.0, %v335
        %v337 = vpop.f32.mrf.mxu0
        %338 = vdwg.mxu0
        %vm339 = vcmask 261120
        %340 = vst.msk [vmem:[%s161] sm:$0xff] %vm339, %v336
        %s341 = sand.u32 %s93, 1
        %s342 = scalar_lea.sflag [#allocation3], %s341
        %s343 = sand.u32 %s93, 1
        %s344 = smul.addr %s343, 8
        %s345 = scalar_lea.vmem [#allocation2], %s344
        // Predicated region
        $region33: #{tpu_custom_call.1} parent=31 // pred_check
          %p346 = pneg %p103
        $region34: #{tpu_custom_call.1} parent=31 // pred_check_branch
          %348 = sbr.rel (%p346) target = $region36
        $region35: #{tpu_custom_call.1} parent=31 // pred_region
          %s350 = ssub.s32 128, 128
          %351 = vsyncadd %s342, %s350
          %s352 = smul.addr %s17, 128
          %s353 = scalar_lea.hbm %s3, %s352
          %s355 = sshll.u32 %s345, 4
          %s356 = int_to_ptr.vmem [resolvable:$true] %s355
          %358 = dma.vmem_to_hbm [thread:$0]  %s356, 128, %s353, %s342
        $region36: #{tpu_custom_call.1} parent=31 // pred_fallthru
          _
      $region32: #{tpu_custom_call.1} parent=5 // pred_fallthru
        _
      %p359 = scmp.le.s32.totalorder 2, %s12
      // Predicated region
      $region37: #{tpu_custom_call.1} parent=5 // pred_check
        %p360 = pneg %p359
      $region38: #{tpu_custom_call.1} parent=5 // pred_check_branch
        %362 = sbr.rel (%p360) target = $region40
      $region39: #{tpu_custom_call.1} parent=5 // pred_region
        %s363 = ssub.s32 %s12, 2
        // Predicated region
        $region41: #{tpu_custom_call.1} parent=39 // pred_check
          %p364 = pneg %p109
        $region42: #{tpu_custom_call.1} parent=39 // pred_check_branch
          %366 = sbr.rel (%p364) target = $region44
        $region43: #{tpu_custom_call.1} parent=39 // pred_region
          %s367 = sand.u32 %s94, 1
          %s368 = scalar_lea.sflag [#allocation3], %s367
          %s369 = sand.u32 %s94, 1
          %s370 = smul.addr %s369, 8
          %s371 = scalar_lea.vmem [#allocation2], %s370
          %372 = dma.done %s368, 128
        $region44: #{tpu_custom_call.1} parent=39 // pred_fallthru
          _
      $region40: #{tpu_custom_call.1} parent=5 // pred_fallthru
        _
    $region6: #{tpu_custom_call.1} parent=1 // loop_footer
      %s16 = sadd.s32 1, %s12
    $region7: #{tpu_custom_call.1} parent=1 // loop_footer_branch
      %11 = sbr.rel target = $region3
    $region8: #{tpu_custom_call.1} parent=1 // loop_exit
      _
    %373 = vsyncpa [#allocation3], 1
    %s374 = scalar_lea.sflag [#allocation3], 1
    %375 = vsyncpa %s374, 1

</llo_original>
